<compile_context>
chip_gen: v5e
topology: v5e:2x2
jax: 0.10.0
libtpu: 0.0.40
codegen_flags: <defaults>
</compile_context>

<pallas_src>
import jax
import jax.numpy as jnp
from jax.experimental import pallas as pl
from jax.experimental.pallas import tpu as pltpu


IN_FEATURES = 9
LAYER_DIMS = [(9, 16), (16, 6), (6, 4), (4, 1)]  # (fan_in, fan_out) per layer


def mlp_kernel(p1_ref, p2_ref, p3_ref, p4_ref, x_ref, o_ref):
    """All refs are VMEM tiles. x_ref: (9, TB) feature-major; o_ref: (1, TB)."""

    def layer(p_ref, h, nin):
        p = p_ref[...]                      # (out, nin + 1) = [W | b]
        w = p[:, :nin]                      # (out, nin)
        b = p[:, nin:nin + 1]               # (out, 1) -> broadcasts over lanes
        z = jnp.dot(w, h, preferred_element_type=jnp.float32) + b
        # sigmoid(z) == 0.5 * tanh(0.5 * z) + 0.5  (single EUP transcendental)
        return 0.5 * jnp.tanh(0.5 * z) + 0.5

    h = x_ref[...]                          # (9, TB), batch on lanes
    h = layer(p1_ref, h, 9)                 # (16, TB)
    h = layer(p2_ref, h, 16)                # (6, TB)
    h = layer(p3_ref, h, 6)                 # (4, TB)
    h = layer(p4_ref, h, 4)                 # (1, TB)
    o_ref[...] = h.astype(o_ref.dtype)


def _round_up(n, m):
    return ((n + m - 1) // m) * m


def _pack_layer(w, b):
    # torch layout: w (out, in), b (out,) -> slab (out, in + 1) = [W | b]
    return jnp.concatenate([w, b[:, None]], axis=1).astype(jnp.float32)


def mlp_forward(x, params, *, tb=1024):
    """x: (B, 9) float32 -> (B, 1) float32 (same semantics as the torch Model)."""
    B, F = x.shape
    assert F == IN_FEATURES
    w1, b1, w2, b2, w3, b3, w4, b4 = params
    slabs = (_pack_layer(w1, b1), _pack_layer(w2, b2),
             _pack_layer(w3, b3), _pack_layer(w4, b4))

    # Batch tile: multiple of 128 lanes, no larger than needed; pad B to it.
    tb = min(tb, _round_up(B, 128))
    b_pad = _round_up(B, tb)

    # Feature-major input: (9, B_pad), batch on the lane axis, zero-padded tail.
    x_t = jnp.zeros((F, b_pad), jnp.float32).at[:, :B].set(x.T)

    grid = (b_pad // tb,)

    def const_spec(shape):
        # Params: whole array every step -> loaded once, VMEM-resident.
        return pl.BlockSpec(shape, lambda i: (0, 0))

    out = pl.pallas_call(
        mlp_kernel,
        out_shape=jax.ShapeDtypeStruct((1, b_pad), jnp.float32),
        grid=grid,
        in_specs=[const_spec(s.shape) for s in slabs]
                 + [pl.BlockSpec((F, tb), lambda i: (0, i))],
        out_specs=pl.BlockSpec((1, tb), lambda i: (0, i)),
        compiler_params=pltpu.CompilerParams(
            dimension_semantics=("parallel",)),   # megacore-shardable batch axis
    )(*slabs, x_t)

    return out[0, :B].reshape(B, 1)


def init_params(key):
    """Deterministic params in torch.nn.Linear layout: W (out, in), b (out,)."""
    params = []
    for i, (fan_in, fan_out) in enumerate(LAYER_DIMS):
        kw, kb = jax.random.split(jax.random.fold_in(key, i))
        bound = 1.0 / (float(fan_in) ** 0.5)      # PyTorch default init range
        w = jax.random.uniform(kw, (fan_out, fan_in), jnp.float32, -bound, bound)
        b = jax.random.uniform(kb, (fan_out,), jnp.float32, -bound, bound)
        params.extend([w, b])
    return tuple(params)


def reference_forward(x, params):
    w1, b1, w2, b2, w3, b3, w4, b4 = params
    h = jax.nn.sigmoid(x @ w1.T + b1)
    h = jax.nn.sigmoid(h @ w2.T + b2)
    h = jax.nn.sigmoid(h @ w3.T + b3)
    return jax.nn.sigmoid(h @ w4.T + b4)


if __name__ == "__main__":
    key = jax.random.PRNGKey(0)
    k_x, k_p, k_x2 = jax.random.split(key, 3)
    params = init_params(k_p)

    # Small shape consistent with the module: batch=8, features=9.
    B = 8
    x = jax.random.normal(k_x, (B, IN_FEATURES), jnp.float32)
    out = jax.block_until_ready(mlp_forward(x, params))
    ref = reference_forward(x, params)
    assert out.shape == (B, 1)
    assert jnp.allclose(out, ref, atol=1e-5, rtol=1e-5)

    # Exercise the pipelined multi-tile path (padding + batch grid).
    B2 = 2304  # not a multiple of the 1024-row tile -> tests tail padding
    x2 = jax.random.normal(k_x2, (B2, IN_FEATURES), jnp.float32)
    out2 = jax.block_until_ready(mlp_forward(x2, params))
    ref2 = reference_forward(x2, params)
    assert out2.shape == (B2, 1)
    assert jnp.allclose(out2, ref2, atol=1e-5, rtol=1e-5)

    print("KERNEL_OK")
</pallas_src>

<mosaic_0001>
module attributes {stable_mosaic.version = 11 : i64} {
  func.func @mlp_kernel(%arg0: i32, %arg1: memref<16x10xf32, #tpu.memory_space<vmem>>, %arg2: memref<6x17xf32, #tpu.memory_space<vmem>>, %arg3: memref<4x7xf32, #tpu.memory_space<vmem>>, %arg4: memref<1x5xf32, #tpu.memory_space<vmem>>, %arg5: memref<9x128xf32, #tpu.memory_space<vmem>>, %arg6: memref<1x128xf32, #tpu.memory_space<vmem>>) attributes {dimension_semantics = [#tpu.dimension_semantics<parallel>], iteration_bounds = array<i64: 1>, scalar_prefetch = 0 : i64, scratch_operands = 0 : i64, tpu.core_type = #tpu.core_type<tc>, window_params = [{pipeline_mode = #tpu.pipeline_mode<synchronous>, transform_indices = @transform_0, window_bounds = array<i64: 16, 10>}, {pipeline_mode = #tpu.pipeline_mode<synchronous>, transform_indices = @transform_1, window_bounds = array<i64: 6, 17>}, {pipeline_mode = #tpu.pipeline_mode<synchronous>, transform_indices = @transform_2, window_bounds = array<i64: 4, 7>}, {pipeline_mode = #tpu.pipeline_mode<synchronous>, transform_indices = @transform_3, window_bounds = array<i64: 1, 5>}, {transform_indices = @transform_4, window_bounds = array<i64: 9, 128>}, {transform_indices = @transform_5, window_bounds = array<i64: 1, 128>}]} {
    %c0 = arith.constant 0 : index
    %c0_0 = arith.constant 0 : index
    %0 = vector.load %arg5[%c0, %c0_0] : memref<9x128xf32, #tpu.memory_space<vmem>>, vector<9x128xf32>
    %c0_1 = arith.constant 0 : index
    %c0_2 = arith.constant 0 : index
    %1 = vector.load %arg1[%c0_1, %c0_2] : memref<16x10xf32, #tpu.memory_space<vmem>>, vector<16x10xf32>
    %2 = vector.extract_strided_slice %1 {offsets = [0, 0], sizes = [16, 9], strides = [1, 1]} : vector<16x10xf32> to vector<16x9xf32>
    %3 = vector.extract_strided_slice %1 {offsets = [0, 9], sizes = [16, 1], strides = [1, 1]} : vector<16x10xf32> to vector<16x1xf32>
    %cst = arith.constant dense<0.000000e+00> : vector<16x128xf32>
    %4 = tpu.matmul %2, %0, %cst {dimension_numbers = #tpu.dot_dimension_numbers<[1], [0], [0], [1], [0, 0, 1, 1], [], []>} : vector<16x9xf32>, vector<9x128xf32>, vector<16x128xf32> -> vector<16x128xf32>
    %5 = vector.broadcast %3 : vector<16x1xf32> to vector<16x128xf32>
    %6 = arith.addf %4, %5 : vector<16x128xf32>
    %cst_3 = arith.constant 5.000000e-01 : f32
    %7 = vector.broadcast %cst_3 : f32 to vector<16x128xf32>
    %8 = arith.mulf %7, %6 : vector<16x128xf32>
    %9 = math.tanh %8 : vector<16x128xf32>
    %cst_4 = arith.constant 5.000000e-01 : f32
    %10 = vector.broadcast %cst_4 : f32 to vector<16x128xf32>
    %11 = arith.mulf %10, %9 : vector<16x128xf32>
    %cst_5 = arith.constant 5.000000e-01 : f32
    %12 = vector.broadcast %cst_5 : f32 to vector<16x128xf32>
    %13 = arith.addf %11, %12 : vector<16x128xf32>
    %c0_6 = arith.constant 0 : index
    %c0_7 = arith.constant 0 : index
    %14 = vector.load %arg2[%c0_6, %c0_7] : memref<6x17xf32, #tpu.memory_space<vmem>>, vector<6x17xf32>
    %15 = vector.extract_strided_slice %14 {offsets = [0, 0], sizes = [6, 16], strides = [1, 1]} : vector<6x17xf32> to vector<6x16xf32>
    %16 = vector.extract_strided_slice %14 {offsets = [0, 16], sizes = [6, 1], strides = [1, 1]} : vector<6x17xf32> to vector<6x1xf32>
    %cst_8 = arith.constant dense<0.000000e+00> : vector<6x128xf32>
    %17 = tpu.matmul %15, %13, %cst_8 {dimension_numbers = #tpu.dot_dimension_numbers<[1], [0], [0], [1], [0, 0, 1, 1], [], []>} : vector<6x16xf32>, vector<16x128xf32>, vector<6x128xf32> -> vector<6x128xf32>
    %18 = vector.broadcast %16 : vector<6x1xf32> to vector<6x128xf32>
    %19 = arith.addf %17, %18 : vector<6x128xf32>
    %cst_9 = arith.constant 5.000000e-01 : f32
    %20 = vector.broadcast %cst_9 : f32 to vector<6x128xf32>
    %21 = arith.mulf %20, %19 : vector<6x128xf32>
    %22 = math.tanh %21 : vector<6x128xf32>
    %cst_10 = arith.constant 5.000000e-01 : f32
    %23 = vector.broadcast %cst_10 : f32 to vector<6x128xf32>
    %24 = arith.mulf %23, %22 : vector<6x128xf32>
    %cst_11 = arith.constant 5.000000e-01 : f32
    %25 = vector.broadcast %cst_11 : f32 to vector<6x128xf32>
    %26 = arith.addf %24, %25 : vector<6x128xf32>
    %c0_12 = arith.constant 0 : index
    %c0_13 = arith.constant 0 : index
    %27 = vector.load %arg3[%c0_12, %c0_13] : memref<4x7xf32, #tpu.memory_space<vmem>>, vector<4x7xf32>
    %28 = vector.extract_strided_slice %27 {offsets = [0, 0], sizes = [4, 6], strides = [1, 1]} : vector<4x7xf32> to vector<4x6xf32>
    %29 = vector.extract_strided_slice %27 {offsets = [0, 6], sizes = [4, 1], strides = [1, 1]} : vector<4x7xf32> to vector<4x1xf32>
    %cst_14 = arith.constant dense<0.000000e+00> : vector<4x128xf32>
    %30 = tpu.matmul %28, %26, %cst_14 {dimension_numbers = #tpu.dot_dimension_numbers<[1], [0], [0], [1], [0, 0, 1, 1], [], []>} : vector<4x6xf32>, vector<6x128xf32>, vector<4x128xf32> -> vector<4x128xf32>
    %31 = vector.broadcast %29 : vector<4x1xf32> to vector<4x128xf32>
    %32 = arith.addf %30, %31 : vector<4x128xf32>
    %cst_15 = arith.constant 5.000000e-01 : f32
    %33 = vector.broadcast %cst_15 : f32 to vector<4x128xf32>
    %34 = arith.mulf %33, %32 : vector<4x128xf32>
    %35 = math.tanh %34 : vector<4x128xf32>
    %cst_16 = arith.constant 5.000000e-01 : f32
    %36 = vector.broadcast %cst_16 : f32 to vector<4x128xf32>
    %37 = arith.mulf %36, %35 : vector<4x128xf32>
    %cst_17 = arith.constant 5.000000e-01 : f32
    %38 = vector.broadcast %cst_17 : f32 to vector<4x128xf32>
    %39 = arith.addf %37, %38 : vector<4x128xf32>
    %c0_18 = arith.constant 0 : index
    %c0_19 = arith.constant 0 : index
    %40 = vector.load %arg4[%c0_18, %c0_19] : memref<1x5xf32, #tpu.memory_space<vmem>>, vector<1x5xf32>
    %41 = vector.extract_strided_slice %40 {offsets = [0, 0], sizes = [1, 4], strides = [1, 1]} : vector<1x5xf32> to vector<1x4xf32>
    %42 = vector.extract_strided_slice %40 {offsets = [0, 4], sizes = [1, 1], strides = [1, 1]} : vector<1x5xf32> to vector<1x1xf32>
    %cst_20 = arith.constant dense<0.000000e+00> : vector<1x128xf32>
    %43 = tpu.matmul %41, %39, %cst_20 {dimension_numbers = #tpu.dot_dimension_numbers<[1], [0], [0], [1], [0, 0, 1, 1], [], []>} : vector<1x4xf32>, vector<4x128xf32>, vector<1x128xf32> -> vector<1x128xf32>
    %44 = vector.broadcast %42 : vector<1x1xf32> to vector<1x128xf32>
    %45 = arith.addf %43, %44 : vector<1x128xf32>
    %cst_21 = arith.constant 5.000000e-01 : f32
    %46 = vector.broadcast %cst_21 : f32 to vector<1x128xf32>
    %47 = arith.mulf %46, %45 : vector<1x128xf32>
    %48 = math.tanh %47 : vector<1x128xf32>
    %cst_22 = arith.constant 5.000000e-01 : f32
    %49 = vector.broadcast %cst_22 : f32 to vector<1x128xf32>
    %50 = arith.mulf %49, %48 : vector<1x128xf32>
    %cst_23 = arith.constant 5.000000e-01 : f32
    %51 = vector.broadcast %cst_23 : f32 to vector<1x128xf32>
    %52 = arith.addf %50, %51 : vector<1x128xf32>
    %c0_24 = arith.constant 0 : index
    %c0_25 = arith.constant 0 : index
    %53 = vector.load %arg6[%c0_24, %c0_25] : memref<1x128xf32, #tpu.memory_space<vmem>>, vector<1x128xf32>
    tpu.vector_store %arg6[%c0_24, %c0_25], %52 {strides = array<i32>} : memref<1x128xf32, #tpu.memory_space<vmem>>, vector<1x128xf32>,
    return
  }
  func.func @transform_0(%arg0: i32) -> (i32, i32) {
    %c0_i32 = arith.constant 0 : i32
    %c0_i32_0 = arith.constant 0 : i32
    %c0_i32_1 = arith.constant 0 : i32
    return %c0_i32, %c0_i32_0 : i32, i32
  }
  func.func @transform_1(%arg0: i32) -> (i32, i32) {
    %c0_i32 = arith.constant 0 : i32
    %c0_i32_0 = arith.constant 0 : i32
    %c0_i32_1 = arith.constant 0 : i32
    return %c0_i32, %c0_i32_0 : i32, i32
  }
  func.func @transform_2(%arg0: i32) -> (i32, i32) {
    %c0_i32 = arith.constant 0 : i32
    %c0_i32_0 = arith.constant 0 : i32
    %c0_i32_1 = arith.constant 0 : i32
    return %c0_i32, %c0_i32_0 : i32, i32
  }
  func.func @transform_3(%arg0: i32) -> (i32, i32) {
    %c0_i32 = arith.constant 0 : i32
    %c0_i32_0 = arith.constant 0 : i32
    %c0_i32_1 = arith.constant 0 : i32
    return %c0_i32, %c0_i32_0 : i32, i32
  }
  func.func @transform_4(%arg0: i32) -> (i32, i32) {
    %c0_i32 = arith.constant 0 : i32
    %c0_i32_0 = arith.constant 0 : i32
    return %c0_i32, %arg0 : i32, i32
  }
  func.func @transform_5(%arg0: i32) -> (i32, i32) {
    %c0_i32 = arith.constant 0 : i32
    %c0_i32_0 = arith.constant 0 : i32
    return %c0_i32, %arg0 : i32, i32
  }
}

</mosaic_0001>

<llo_original>
// kernel: tpu_custom_call.1
$region0: #{tpu_custom_call.1}
  #allocation0 [shape = 'u32[]', space=smem, size = 0x4, offset = 0x4, fixed_abs, tag = 'smem constant byte address 0x4 - core index']
  #allocation1 [shape = 'u32[72,128]{1,0:T(1,128)}', space=vmem, size = 0x9000, scoped, tag = 'internal scratch']
  %s0 = inlined_call_operand.hbm [shape: f32[16,10], index: 0, kind: input, shape index: {}]
  %s1 = inlined_call_operand.hbm [shape: f32[6,17], index: 1, kind: input, shape index: {}]
  %s2 = inlined_call_operand.hbm [shape: f32[4,7], index: 2, kind: input, shape index: {}]
  %s3 = inlined_call_operand.vmem [shape: f32[1,5], index: 3, kind: input, shape index: {}]
  %s4 = inlined_call_operand.hbm [shape: f32[9,128], index: 4, kind: input, shape index: {}]
  %s5 = inlined_call_operand.hbm [shape: f32[1,128], index: 5, kind: output, shape index: {}]
  %s6 = sld [smem:[#allocation0]]
  $region46: #{tpu_custom_call.1} parent=0
    _
  %s8 = ssub.s32 1, %s6
  %s9 = scalar_select 0, %s8, %s6
  $region1: #{tpu_custom_call.1} parent=0
    #allocation2 [shape = 'u8[8192]{0}', space=vmem, size = 0x2000, scoped, tag = 'input window, operand 0, single buffered']
    #allocation3 [shape = 's32[1]{0}', space=sflag, size = 0x4, scoped, tag = 'scoped memory for tpu_custom_call.1']
    #allocation4 [shape = 's32[1]{0}', space=sflag, size = 0x4, scoped, tag = 'scoped memory for tpu_custom_call.1']
    #allocation5 [shape = 'u8[4096]{0}', space=vmem, size = 0x1000, scoped, tag = 'input window, operand 1, single buffered']
    #allocation6 [shape = 's32[1]{0}', space=sflag, size = 0x4, scoped, tag = 'scoped memory for tpu_custom_call.1']
    #allocation7 [shape = 'u8[2048]{0}', space=vmem, size = 0x800, scoped, tag = 'input window, operand 2, single buffered']
    #allocation8 [shape = 'u8[8192]{0}', space=vmem, size = 0x2000, scoped, tag = 'input window, operand 4, single buffered']
    #allocation9 [shape = 's32[1]{0}', space=sflag, size = 0x4, scoped, tag = 'scoped memory for tpu_custom_call.1']
    #allocation10 [shape = 'u8[512]{0}', space=vmem, size = 0x400, scoped, tag = 'output window, operand 0, single buffered']
    %10 = vsyncpa [#allocation3], 0
    %11 = vsyncpa [#allocation6], 0
    %12 = vsyncpa [#allocation9], 0
    %13 = vsyncpa [#allocation4], 0
    // Predicated region
    $region2: #{tpu_custom_call.1} parent=1 // pred_check
      _
    $region3: #{tpu_custom_call.1} parent=1 // pred_check_branch
      %15 = sbr.rel (0) target = $region5
    $region4: #{tpu_custom_call.1} parent=1 // pred_region
      %17 = vsyncadd [#allocation3], 0
      %s18 = sshll.u32 %s0, 4
      %s19 = int_to_ptr.hbm [resolvable:$true] %s18
      %s20 = sshll.u32 [#allocation2], 4
      %s21 = int_to_ptr.vmem [resolvable:$true] %s20
      %26 = dma.hbm_to_vmem [thread:$0]  %s19, 256, %s21, [#allocation3], 128, 128, 8
    $region5: #{tpu_custom_call.1} parent=1 // pred_fallthru
      _
    // Predicated region
    $region6: #{tpu_custom_call.1} parent=1 // pred_check
      _
    $region7: #{tpu_custom_call.1} parent=1 // pred_check_branch
      %28 = sbr.rel (0) target = $region9
    $region8: #{tpu_custom_call.1} parent=1 // pred_region
      %30 = vsyncadd [#allocation6], 0
      %s32 = sshll.u32 %s1, 4
      %s33 = int_to_ptr.hbm [resolvable:$true] %s32
      %s34 = sshll.u32 [#allocation5], 4
      %s35 = int_to_ptr.vmem [resolvable:$true] %s34
      %37 = dma.hbm_to_vmem [thread:$0]  %s33, 128, %s35, [#allocation6]
    $region9: #{tpu_custom_call.1} parent=1 // pred_fallthru
      _
    // Predicated region
    $region10: #{tpu_custom_call.1} parent=1 // pred_check
      _
    $region11: #{tpu_custom_call.1} parent=1 // pred_check_branch
      %39 = sbr.rel (0) target = $region13
    $region12: #{tpu_custom_call.1} parent=1 // pred_region
      %41 = vsyncadd [#allocation6], 0
      %s43 = sshll.u32 %s2, 4
      %s44 = int_to_ptr.hbm [resolvable:$true] %s43
      %s45 = sshll.u32 [#allocation7], 4
      %s46 = int_to_ptr.vmem [resolvable:$true] %s45
      %48 = dma.hbm_to_vmem [thread:$0]  %s44, 64, %s46, [#allocation6]
    $region13: #{tpu_custom_call.1} parent=1 // pred_fallthru
      _
    // Predicated region
    $region14: #{tpu_custom_call.1} parent=1 // pred_check
      _
    $region15: #{tpu_custom_call.1} parent=1 // pred_check_branch
      %50 = sbr.rel (0) target = $region17
    $region16: #{tpu_custom_call.1} parent=1 // pred_region
      _
    $region17: #{tpu_custom_call.1} parent=1 // pred_fallthru
      _
    // Predicated region
    $region18: #{tpu_custom_call.1} parent=1 // pred_check
      _
    $region19: #{tpu_custom_call.1} parent=1 // pred_check_branch
      %52 = sbr.rel (0) target = $region21
    $region20: #{tpu_custom_call.1} parent=1 // pred_region
      %54 = vsyncadd [#allocation9], 0
      %s55 = sshll.u32 %s4, 4
      %s56 = int_to_ptr.hbm [resolvable:$true] %s55
      %s57 = sshll.u32 [#allocation8], 4
      %s58 = int_to_ptr.vmem [resolvable:$true] %s57
      %63 = dma.hbm_to_vmem [thread:$0]  %s56, 256, %s58, [#allocation9], 128, 128, 8
    $region21: #{tpu_custom_call.1} parent=1 // pred_fallthru
      _
    // Predicated region
    $region22: #{tpu_custom_call.1} parent=1 // pred_check
      _
    $region23: #{tpu_custom_call.1} parent=1 // pred_check_branch
      %65 = sbr.rel (0) target = $region25
    $region24: #{tpu_custom_call.1} parent=1 // pred_region
      %67 = dma.done [#allocation3], 256
    $region25: #{tpu_custom_call.1} parent=1 // pred_fallthru
      _
    // Predicated region
    $region26: #{tpu_custom_call.1} parent=1 // pred_check
      _
    $region27: #{tpu_custom_call.1} parent=1 // pred_check_branch
      %69 = sbr.rel (0) target = $region29
    $region28: #{tpu_custom_call.1} parent=1 // pred_region
      %71 = dma.done [#allocation6], 128
    $region29: #{tpu_custom_call.1} parent=1 // pred_fallthru
      _
    // Predicated region
    $region30: #{tpu_custom_call.1} parent=1 // pred_check
      _
    $region31: #{tpu_custom_call.1} parent=1 // pred_check_branch
      %73 = sbr.rel (0) target = $region33
    $region32: #{tpu_custom_call.1} parent=1 // pred_region
      %75 = dma.done [#allocation6], 64
    $region33: #{tpu_custom_call.1} parent=1 // pred_fallthru
      _
    // Predicated region
    $region34: #{tpu_custom_call.1} parent=1 // pred_check
      _
    $region35: #{tpu_custom_call.1} parent=1 // pred_check_branch
      %77 = sbr.rel (0) target = $region37
    $region36: #{tpu_custom_call.1} parent=1 // pred_region
      %79 = dma.done [#allocation9], 256
    $region37: #{tpu_custom_call.1} parent=1 // pred_fallthru
      _
    %v80 = vld [vmem:[#allocation8] sm:$0xff]
    %v81 = vld [vmem:[#allocation8 + $0x8] sm:$0x1]
    %v82 = vld [vmem:[#allocation2] sm:$0xff]
    %v83 = vld [vmem:[#allocation2 + $0x8] sm:$0xff]
    %85 = vset.pattern.permute.xlu0 9
    %86 = vperm.xlu0 %85, %v82
    %v87 = vpop.permute.xlu0 %86
    %90 = vset.pattern.permute.xlu0 9
    %91 = vperm.xlu0 %90, %v83
    %v92 = vpop.permute.xlu0 %91
    %vm94 = vcmask 72704
    %v95 = vsel %vm94, %v82, 0
    %v97 = vsel %vm94, %v83, 0
    %vm99 = vcmask 1040384
    %v101 = vsel %vm99, %v81, 0
    %103 = vmatpush.msra.mxu0 0.0
    %104 = vmatpush.msra.mxu0 0.0
    %105 = vmatpush.msra.mxu0 0.0
    %106 = vmatpush.msra.mxu0 0.0
    %107 = vmatpush.msra.mxu0 0.0
    %108 = vmatpush.msra.mxu0 0.0
    %109 = vmatpush.msra.mxu0 0.0
    %110 = vmatpush.msra.mxu0 0.0
    %111 = vmatpush.msra.mxu0 0.0
    %112 = vmatpush.msra.mxu0 0.0
    %113 = vmatpush.msra.mxu0 0.0
    %114 = vmatpush.msra.mxu0 0.0
    %115 = vmatpush.msra.mxu0 0.0
    %116 = vmatpush.msra.mxu0 0.0
    %117 = vmatpush.msra.mxu0 %v101
    %118 = vmatpush.msra.mxu0 %v80
    %119 = vmatmul.f32.gmra.mxu0 %v95
    %v120 = vpop.f32.mrf.mxu0
    %v121 = vadd.f32 %v87, %v120
    %122 = vmatmul.f32.gmra.mxu0 %v97
    %v123 = vpop.f32.mrf.mxu0
    %v124 = vadd.f32 %v92, %v123
    %125 = vdwg.mxu0
    %v126 = vmul.f32 %v121, 0.5
    %v127 = vmul.f32 %v124, 0.5
    %v128 = vtanh.pop %v126
    %v129 = vtanh.pop %v127
    %v130 = vmul.f32 %v128, 0.5
    %v131 = vmul.f32 %v129, 0.5
    %v132 = vadd.f32 %v130, 0.5
    %v133 = vadd.f32 %v131, 0.5
    %v134 = vld [vmem:[#allocation5] sm:$0x3f]
    %136 = vset.pattern.permute.xlu0 16
    %137 = vperm.xlu0 %136, %v134
    %v138 = vpop.permute.xlu0 %137
    %vm140 = vcmask 130048
    %v141 = vsel %vm140, %v134, 0
    %143 = vmatpush.msra.mxu0 0.0
    %144 = vmatpush.msra.mxu0 0.0
    %145 = vmatpush.msra.mxu0 0.0
    %146 = vmatpush.msra.mxu0 0.0
    %147 = vmatpush.msra.mxu0 0.0
    %148 = vmatpush.msra.mxu0 0.0
    %149 = vmatpush.msra.mxu0 0.0
    %150 = vmatpush.msra.mxu0 0.0
    %151 = vmatpush.msra.mxu0 0.0
    %152 = vmatpush.msra.mxu0 0.0
    %153 = vmatpush.msra.mxu0 0.0
    %154 = vmatpush.msra.mxu0 0.0
    %155 = vmatpush.msra.mxu0 0.0
    %156 = vmatpush.msra.mxu0 0.0
    %157 = vmatpush.msra.mxu0 %v133
    %158 = vmatpush.msra.mxu0 %v132
    %159 = vmatmul.f32.gmra.mxu0 %v141
    %v160 = vpop.f32.mrf.mxu0
    %v161 = vadd.f32 %v138, %v160
    %162 = vdwg.mxu0
    %v163 = vmul.f32 %v161, 0.5
    %v164 = vtanh.pop %v163
    %v165 = vmul.f32 %v164, 0.5
    %v166 = vadd.f32 %v165, 0.5
    %v167 = vld [vmem:[#allocation7] sm:$0xf]
    %169 = vset.pattern.permute.xlu0 6
    %170 = vperm.xlu0 %169, %v167
    %v171 = vpop.permute.xlu0 %170
    %vm173 = vcmask 48128
    %v174 = vsel %vm173, %v167, 0
    %vm176 = vcmask 1045504
    %v178 = vsel %vm176, %v166, 0
    %180 = vmatpush.msra.mxu0 0.0
    %181 = vmatpush.msra.mxu0 0.0
    %182 = vmatpush.msra.mxu0 0.0
    %183 = vmatpush.msra.mxu0 0.0
    %184 = vmatpush.msra.mxu0 0.0
    %185 = vmatpush.msra.mxu0 0.0
    %186 = vmatpush.msra.mxu0 0.0
    %187 = vmatpush.msra.mxu0 0.0
    %188 = vmatpush.msra.mxu0 0.0
    %189 = vmatpush.msra.mxu0 0.0
    %190 = vmatpush.msra.mxu0 0.0
    %191 = vmatpush.msra.mxu0 0.0
    %192 = vmatpush.msra.mxu0 0.0
    %193 = vmatpush.msra.mxu0 0.0
    %194 = vmatpush.msra.mxu0 0.0
    %195 = vmatpush.msra.mxu0 %v178
    %196 = vmatmul.f32.gmra.mxu0 %v174
    %v197 = vpop.f32.mrf.mxu0
    %v198 = vadd.f32 %v171, %v197
    %199 = vdwg.mxu0
    %v200 = vmul.f32 %v198, 0.5
    %v201 = vtanh.pop %v200
    %v202 = vmul.f32 %v201, 0.5
    %v203 = vadd.f32 %v202, 0.5
    %v204 = vld [vmem:[%s3] sm:$0x1]
    %206 = vset.pattern.permute.xlu0 4
    %207 = vperm.xlu0 %206, %v204
    %v208 = vpop.permute.xlu0 %207
    %v210 = vperm.slane %v208, 0
    %vm211 = vcmask 31744
    %v212 = vsel %vm211, %v204, 0
    %vm214 = vcmask 1043456
    %v216 = vsel %vm214, %v203, 0
    %218 = vmatpush.msra.mxu0 0.0
    %219 = vmatpush.msra.mxu0 0.0
    %220 = vmatpush.msra.mxu0 0.0
    %221 = vmatpush.msra.mxu0 0.0
    %222 = vmatpush.msra.mxu0 0.0
    %223 = vmatpush.msra.mxu0 0.0
    %224 = vmatpush.msra.mxu0 0.0
    %225 = vmatpush.msra.mxu0 0.0
    %226 = vmatpush.msra.mxu0 0.0
    %227 = vmatpush.msra.mxu0 0.0
    %228 = vmatpush.msra.mxu0 0.0
    %229 = vmatpush.msra.mxu0 0.0
    %230 = vmatpush.msra.mxu0 0.0
    %231 = vmatpush.msra.mxu0 0.0
    %232 = vmatpush.msra.mxu0 0.0
    %233 = vmatpush.msra.mxu0 %v216
    %234 = vmatmul.f32.gmra.mxu0 %v212
    %v235 = vpop.f32.mrf.mxu0
    %v236 = vadd.f32 %v210, %v235
    %237 = vdwg.mxu0
    %v238 = vmul.f32 %v236, 0.5
    %v239 = vtanh.pop %v238
    %v240 = vmul.f32 %v239, 0.5
    %v241 = vadd.f32 %v240, 0.5
    %242 = vst [vmem:[#allocation10] sm:$0x1] %v241
    // Predicated region
    $region38: #{tpu_custom_call.1} parent=1 // pred_check
      _
    $region39: #{tpu_custom_call.1} parent=1 // pred_check_branch
      %244 = sbr.rel (0) target = $region41
    $region40: #{tpu_custom_call.1} parent=1 // pred_region
      %246 = vsyncadd [#allocation4], 0
      %s248 = sshll.u32 [#allocation10], 4
      %s249 = int_to_ptr.vmem [resolvable:$true] %s248
      %s250 = sshll.u32 %s5, 4
      %s251 = int_to_ptr.hbm [resolvable:$true] %s250
      %253 = dma.vmem_to_hbm [thread:$0]  %s249, 16, %s251, [#allocation4]
    $region41: #{tpu_custom_call.1} parent=1 // pred_fallthru
      _
    // Predicated region
    $region42: #{tpu_custom_call.1} parent=1 // pred_check
      _
    $region43: #{tpu_custom_call.1} parent=1 // pred_check_branch
      %255 = sbr.rel (0) target = $region45
    $region44: #{tpu_custom_call.1} parent=1 // pred_region
      %257 = dma.done [#allocation4], 16
    $region45: #{tpu_custom_call.1} parent=1 // pred_fallthru
      _
    %258 = vsyncpa [#allocation3], 1
    %259 = vsyncpa [#allocation6], 1
    %260 = vsyncpa [#allocation9], 1
    %261 = vsyncpa [#allocation4], 1

</llo_original>
